<compile_context>
chip_gen: v5e
topology: v5e:2x2
jax: 0.10.0
libtpu: 0.0.40
codegen_flags: <defaults>
</compile_context>

<pallas_src>
import functools

import jax
import jax.numpy as jnp
from jax.experimental import pallas as pl
from jax.experimental.pallas import tpu as pltpu

_EPS = 2.220446049250313e-16  # sys.float_info.epsilon
_LANES = 128


# --------------------------------------------------------------------------
# Kernels
# --------------------------------------------------------------------------
def _make_row_mask(rows, tile_rows, lanes):
    """Zero out rows >= `rows` of the current block (static no-op if aligned)."""
    if rows % tile_rows == 0:
        return lambda x: x

    def mask(x):
        rid = (pl.program_id(0) * tile_rows
               + jax.lax.broadcasted_iota(jnp.int32, (tile_rows, lanes), 0))
        return jnp.where(rid < rows, x, jnp.zeros_like(x))

    return mask


def _small_kernel(inp_ref, trg_ref, out_ref):
    """Whole-problem kernel: sums + KL in one pass (inputs resident in VMEM)."""
    eps = jnp.float32(_EPS)
    x = inp_ref[...].astype(jnp.float32)
    t = trg_ref[...].astype(jnp.float32)
    inp_n = x / jnp.sum(x, keepdims=True)
    trg_n = t / jnp.sum(t, keepdims=True)
    term = trg_n * jnp.log(eps + trg_n / (inp_n + eps))
    out_ref[...] = jnp.sum(term, keepdims=True)


def _sums_kernel(inp_ref, trg_ref, si_ref, st_ref, *, rows, tile_rows, lanes):
    """Pass 1: per-block (8,128) partial sums (pure VPU adds, no XLU reduce)."""
    mask = _make_row_mask(rows, tile_rows, lanes)
    x = mask(inp_ref[...].astype(jnp.float32))
    t = mask(trg_ref[...].astype(jnp.float32))
    si_ref[...] = x.reshape(-1, 8, lanes).sum(axis=0, keepdims=True)
    st_ref[...] = t.reshape(-1, 8, lanes).sum(axis=0, keepdims=True)


def _kl_kernel(inv_si_ref, inv_st_ref, inp_ref, trg_ref, out_ref,
               *, rows, tile_rows, lanes):
    """Pass 2: per-block (8,128) partial KL terms using precomputed 1/sums."""
    eps = jnp.float32(_EPS)
    mask = _make_row_mask(rows, tile_rows, lanes)
    x = mask(inp_ref[...].astype(jnp.float32))
    t = mask(trg_ref[...].astype(jnp.float32))
    inp_n = x * inv_si_ref[...]            # (tile_rows, lanes) * (1, 1)
    trg_n = t * inv_st_ref[...]
    term = trg_n * jnp.log(eps + trg_n / (inp_n + eps))
    out_ref[...] = term.reshape(-1, 8, lanes).sum(axis=0, keepdims=True)


# --------------------------------------------------------------------------
# Wrapper
# --------------------------------------------------------------------------
def _as_slab(x, lanes):
    """Flatten to a lane-dense (rows, lanes) slab, keeping the native dtype.

    If size % lanes == 0 this is a free (bitcast) reshape; otherwise only a
    minimal (< lanes elements) zero pad is appended — zeros contribute nothing
    to the sums nor to the KL terms (0 * log(eps) == 0)."""
    total = x.size
    flat = x.reshape(-1)
    rem = total % lanes
    if rem != 0:
        flat = jnp.pad(flat, (0, lanes - rem))
    rows = flat.size // lanes
    return flat.reshape(rows, lanes), rows


def _kld_loss(inp, trg, *, tile_rows=2048, lanes=_LANES, small_elems=512 * 1024):
    """KLDLoss.forward(inp, trg) -> scalar f32.  inp/trg: any shapes, same size."""
    assert inp.size == trg.size, "inp and trg must have the same number of elements"
    assert tile_rows % 8 == 0
    total = int(inp.size)

    inp2d, rows = _as_slab(inp, lanes)
    trg2d, _ = _as_slab(trg, lanes)
    itemsize = max(jnp.dtype(inp.dtype).itemsize, jnp.dtype(trg.dtype).itemsize)

    # -------- fast path: both arrays fit in VMEM -> single pass -------------
    if total <= small_elems:
        out = pl.pallas_call(
            _small_kernel,
            out_shape=jax.ShapeDtypeStruct((1, 1), jnp.float32),
            grid_spec=pltpu.PrefetchScalarGridSpec(
                num_scalar_prefetch=0,
                grid=(1,),
                in_specs=[
                    pl.BlockSpec((rows, lanes), lambda i: (0, 0)),
                    pl.BlockSpec((rows, lanes), lambda i: (0, 0)),
                ],
                out_specs=pl.BlockSpec((1, 1), lambda i: (0, 0)),
            ),
            compiler_params=pltpu.CompilerParams(
                dimension_semantics=("arbitrary",),
                vmem_limit_bytes=32 * 1024 * 1024,
            ),
            cost_estimate=pl.CostEstimate(
                flops=6 * total,
                transcendentals=2 * total,
                bytes_accessed=2 * rows * lanes * itemsize + 4,
            ),
        )(inp2d, trg2d)
        return out[0, 0]

    # -------- streaming path: two big-block passes ---------------------------
    tile_rows = min(tile_rows, -(-rows // 8) * 8)
    n_blocks = -(-rows // tile_rows)

    blk = pl.BlockSpec((tile_rows, lanes), lambda i: (i, 0))
    part_spec = pl.BlockSpec((1, 8, lanes), lambda i: (i, 0, 0))
    part_shape = jax.ShapeDtypeStruct((n_blocks, 8, lanes), jnp.float32)
    parallel = pltpu.CompilerParams(dimension_semantics=("parallel",))
    stream_bytes = 2 * rows * lanes * itemsize

    # pass 1: partial sums of inp and trg
    si_part, st_part = pl.pallas_call(
        functools.partial(_sums_kernel, rows=rows, tile_rows=tile_rows, lanes=lanes),
        out_shape=(part_shape, part_shape),
        grid_spec=pltpu.PrefetchScalarGridSpec(
            num_scalar_prefetch=0,
            grid=(n_blocks,),
            in_specs=[blk, blk],
            out_specs=[part_spec, part_spec],
        ),
        compiler_params=parallel,
        cost_estimate=pl.CostEstimate(
            flops=2 * total,
            transcendentals=0,
            bytes_accessed=stream_bytes + 2 * n_blocks * 8 * lanes * 4,
        ),
    )(inp2d, trg2d)

    inv_si = (1.0 / jnp.sum(si_part)).reshape(1, 1).astype(jnp.float32)
    inv_st = (1.0 / jnp.sum(st_part)).reshape(1, 1).astype(jnp.float32)

    # pass 2: partial KL terms
    scal_spec = pl.BlockSpec((1, 1), lambda i: (0, 0))
    kl_part = pl.pallas_call(
        functools.partial(_kl_kernel, rows=rows, tile_rows=tile_rows, lanes=lanes),
        out_shape=part_shape,
        grid_spec=pltpu.PrefetchScalarGridSpec(
            num_scalar_prefetch=0,
            grid=(n_blocks,),
            in_specs=[scal_spec, scal_spec, blk, blk],
            out_specs=part_spec,
        ),
        compiler_params=parallel,
        cost_estimate=pl.CostEstimate(
            flops=6 * total,
            transcendentals=2 * total,
            bytes_accessed=stream_bytes + n_blocks * 8 * lanes * 4 + 8,
        ),
    )(inv_si, inv_st, inp2d, trg2d)

    return jnp.sum(kl_part)


kld_loss = jax.jit(_kld_loss, static_argnames=("tile_rows", "lanes", "small_elems"))


# --------------------------------------------------------------------------
# Reference & test
# --------------------------------------------------------------------------
def _kld_reference(inp, trg):
    inp = inp.astype(jnp.float32)
    trg = trg.astype(jnp.float32)
    inp_n = inp / jnp.sum(inp)
    trg_n = trg / jnp.sum(trg)
    return jnp.sum(trg_n * jnp.log(_EPS + trg_n / (inp_n + _EPS)))


if __name__ == "__main__":
    key = jax.random.PRNGKey(0)
    k1, k2, k3, k4 = jax.random.split(key, 4)

    # 1) Small saliency-map-like input (NCHW) -> single-pass VMEM fast path.
    shape_small = (2, 4, 16, 16)
    inp_s = jax.random.uniform(k1, shape_small, jnp.float32, 0.01, 1.0)
    trg_s = jax.random.uniform(k2, shape_small, jnp.float32, 0.01, 1.0)
    loss_s = kld_loss(inp_s, trg_s)
    jax.block_until_ready(loss_s)
    ref_s = _kld_reference(inp_s, trg_s)
    assert jnp.allclose(loss_s, ref_s, rtol=1e-5, atol=1e-5), (loss_s, ref_s)

    # 2) Larger map -> streaming 2-pass path with default 2048-row blocks and a
    #    ragged (masked) last block: 3*4*200*256 = 614400 elems = 4800 rows.
    shape_big = (3, 4, 200, 256)
    inp_b = jax.random.uniform(k3, shape_big, jnp.float32, 0.01, 1.0)
    trg_b = jax.random.uniform(k4, shape_big, jnp.float32, 0.01, 1.0)
    loss_b = kld_loss(inp_b, trg_b)
    jax.block_until_ready(loss_b)
    ref_b = _kld_reference(inp_b, trg_b)
    assert jnp.allclose(loss_b, ref_b, rtol=1e-5, atol=1e-5), (loss_b, ref_b)

    print("KERNEL_OK")
</pallas_src>

<mosaic_0001>
module attributes {stable_mosaic.version = 11 : i64} {
  func.func @_small_kernel(%arg0: i32, %arg1: memref<16x128xf32, #tpu.memory_space<vmem>>, %arg2: memref<16x128xf32, #tpu.memory_space<vmem>>, %arg3: memref<1x1xf32, #tpu.memory_space<vmem>>) attributes {dimension_semantics = [#tpu.dimension_semantics<arbitrary>], iteration_bounds = array<i64: 1>, scalar_prefetch = 0 : i64, scratch_operands = 0 : i64, tpu.core_type = #tpu.core_type<tc>, window_params = [{pipeline_mode = #tpu.pipeline_mode<synchronous>, transform_indices = @transform_0, window_bounds = array<i64: 16, 128>}, {pipeline_mode = #tpu.pipeline_mode<synchronous>, transform_indices = @transform_1, window_bounds = array<i64: 16, 128>}, {pipeline_mode = #tpu.pipeline_mode<synchronous>, transform_indices = @transform_2, window_bounds = array<i64: 1, 1>}]} {
    %c0 = arith.constant 0 : index
    %c0_0 = arith.constant 0 : index
    %0 = vector.load %arg1[%c0, %c0_0] : memref<16x128xf32, #tpu.memory_space<vmem>>, vector<16x128xf32>
    %c0_1 = arith.constant 0 : index
    %c0_2 = arith.constant 0 : index
    %1 = vector.load %arg2[%c0_1, %c0_2] : memref<16x128xf32, #tpu.memory_space<vmem>>, vector<16x128xf32>
    %2 = vector.shape_cast %0 : vector<16x128xf32> to vector<1x16x128xf32>
    %cst = arith.constant dense<0.000000e+00> : vector<1xf32>
    %3 = vector.multi_reduction <add>, %2, %cst [1, 2] : vector<1x16x128xf32> to vector<1xf32>
    %4 = vector.shape_cast %3 : vector<1xf32> to vector<1x1x1xf32>
    %5 = vector.extract %4[0, 0, 0] : f32 from vector<1x1x1xf32>
    %6 = vector.broadcast %5 : f32 to vector<1x1xf32>
    %7 = vector.broadcast %6 : vector<1x1xf32> to vector<16x128xf32>
    %8 = arith.divf %0, %7 : vector<16x128xf32>
    %9 = vector.shape_cast %1 : vector<16x128xf32> to vector<1x16x128xf32>
    %cst_3 = arith.constant dense<0.000000e+00> : vector<1xf32>
    %10 = vector.multi_reduction <add>, %9, %cst_3 [1, 2] : vector<1x16x128xf32> to vector<1xf32>
    %11 = vector.shape_cast %10 : vector<1xf32> to vector<1x1x1xf32>
    %12 = vector.extract %11[0, 0, 0] : f32 from vector<1x1x1xf32>
    %13 = vector.broadcast %12 : f32 to vector<1x1xf32>
    %14 = vector.broadcast %13 : vector<1x1xf32> to vector<16x128xf32>
    %15 = arith.divf %1, %14 : vector<16x128xf32>
    %cst_4 = arith.constant 2.22044605E-16 : f32
    %16 = vector.broadcast %cst_4 : f32 to vector<16x128xf32>
    %17 = arith.addf %8, %16 : vector<16x128xf32>
    %18 = arith.divf %15, %17 : vector<16x128xf32>
    %cst_5 = arith.constant 2.22044605E-16 : f32
    %19 = vector.broadcast %cst_5 : f32 to vector<16x128xf32>
    %20 = arith.addf %19, %18 : vector<16x128xf32>
    %21 = math.log %20 : vector<16x128xf32>
    %22 = arith.mulf %15, %21 : vector<16x128xf32>
    %23 = vector.shape_cast %22 : vector<16x128xf32> to vector<1x16x128xf32>
    %cst_6 = arith.constant dense<0.000000e+00> : vector<1xf32>
    %24 = vector.multi_reduction <add>, %23, %cst_6 [1, 2] : vector<1x16x128xf32> to vector<1xf32>
    %25 = vector.shape_cast %24 : vector<1xf32> to vector<1x1x1xf32>
    %26 = vector.extract %25[0, 0, 0] : f32 from vector<1x1x1xf32>
    %27 = vector.broadcast %26 : f32 to vector<1x1xf32>
    %c0_7 = arith.constant 0 : index
    %c0_8 = arith.constant 0 : index
    %28 = vector.load %arg3[%c0_7, %c0_8] : memref<1x1xf32, #tpu.memory_space<vmem>>, vector<1x1xf32>
    tpu.vector_store %arg3[%c0_7, %c0_8], %27 {strides = array<i32>} : memref<1x1xf32, #tpu.memory_space<vmem>>, vector<1x1xf32>,
    return
  }
  func.func @transform_0(%arg0: i32) -> (i32, i32) {
    %c0_i32 = arith.constant 0 : i32
    %c0_i32_0 = arith.constant 0 : i32
    %c0_i32_1 = arith.constant 0 : i32
    return %c0_i32, %c0_i32_0 : i32, i32
  }
  func.func @transform_1(%arg0: i32) -> (i32, i32) {
    %c0_i32 = arith.constant 0 : i32
    %c0_i32_0 = arith.constant 0 : i32
    %c0_i32_1 = arith.constant 0 : i32
    return %c0_i32, %c0_i32_0 : i32, i32
  }
  func.func @transform_2(%arg0: i32) -> (i32, i32) {
    %c0_i32 = arith.constant 0 : i32
    %c0_i32_0 = arith.constant 0 : i32
    %c0_i32_1 = arith.constant 0 : i32
    return %c0_i32, %c0_i32_0 : i32, i32
  }
}

</mosaic_0001>

<llo_original>
// kernel: _kld_loss.1
$region0: #{_kld_loss.1}
  #allocation0 [shape = 'u32[]', space=smem, size = 0x4, offset = 0x4, fixed_abs, tag = 'smem constant byte address 0x4 - core index']
  #allocation1 [shape = 'u32[72,128]{1,0:T(1,128)}', space=vmem, size = 0x9000, scoped, tag = 'internal scratch']
  %s0 = inlined_call_operand.vmem [shape: f32[16,128], index: 0, kind: input, shape index: {}]
  %s1 = inlined_call_operand.vmem [shape: f32[16,128], index: 1, kind: input, shape index: {}]
  %s2 = inlined_call_operand.hbm [shape: f32[1,1], index: 2, kind: output, shape index: {}]
  %s3 = sld [smem:[#allocation0]]
  $region18: #{_kld_loss.1} parent=0
    _
  %s5 = ssub.s32 1, %s3
  %s6 = scalar_select 0, %s5, %s3
  $region1: #{_kld_loss.1} parent=0
    #allocation2 [shape = 'u8[512]{0}', space=vmem, size = 0x400, scoped, tag = 'output window, operand 0, single buffered']
    #allocation3 [shape = 's32[1]{0}', space=sflag, size = 0x4, scoped, tag = 'scoped memory for _kld_loss.1']
    %7 = vsyncpa [#allocation3], 0
    // Predicated region
    $region2: #{_kld_loss.1} parent=1 // pred_check
      _
    $region3: #{_kld_loss.1} parent=1 // pred_check_branch
      %9 = sbr.rel (0) target = $region5
    $region4: #{_kld_loss.1} parent=1 // pred_region
      _
    $region5: #{_kld_loss.1} parent=1 // pred_fallthru
      _
    // Predicated region
    $region6: #{_kld_loss.1} parent=1 // pred_check
      _
    $region7: #{_kld_loss.1} parent=1 // pred_check_branch
      %11 = sbr.rel (0) target = $region9
    $region8: #{_kld_loss.1} parent=1 // pred_region
      _
    $region9: #{_kld_loss.1} parent=1 // pred_fallthru
      _
    %v12 = vld [vmem:[%s0] sm:$0xff]
    %v13 = vld [vmem:[%s0 + $0x8] sm:$0xff]
    %v14 = vld [vmem:[%s1] sm:$0xff]
    %v15 = vld [vmem:[%s1 + $0x8] sm:$0xff]
    %v16 = vadd.f32 %v12, %v13
    %17 = vadd.xlane.f32.xlu0 %v16
    %v18 = vpop.xlane.xlu0 %17
    %v19 = vrot.slane %v18, 4
    %v20 = vadd.f32 %v18, %v19
    %v21 = vrot.slane %v20, 2
    %v22 = vadd.f32 %v20, %v21
    %v23 = vrot.slane %v22, 1
    %v24 = vadd.f32 %v22, %v23
    %s25 = vtos %v24
    %v26 = vstv %s25
    %v27 = vrcp.pop %v26
    %v28 = vmul.f32 %v26, %v27
    %v29 = vsub.f32 1.0, %v28
    %v30 = vmul.f32 %v27, %v29
    %v31 = vadd.f32 %v27, %v30
    %vm32 = vweird.f32 %v26
    %vm33 = vweird.f32 %v27
    %vm34 = vmor %vm32, %vm33
    %v35 = vsel %vm34, %v27, %v31
    %v36 = vand.u32 2147483647, %v26
    %vm37 = vcmp.eq.f32.partialorder %v36, 8.507059e+37
    %v38 = vand.u32 %v26, 2147483648
    %v39 = vor.u32 1.1754944e-38, %v38
    %v40 = vsel %vm37, %v39, %v35
    %v41 = vmul.f32 %v12, %v40
    %v42 = vmul.f32 %v13, %v40
    %v43 = vadd.f32 %v14, %v15
    %44 = vadd.xlane.f32.xlu0 %v43
    %v45 = vpop.xlane.xlu0 %44
    %v46 = vrot.slane %v45, 4
    %v47 = vadd.f32 %v45, %v46
    %v48 = vrot.slane %v47, 2
    %v49 = vadd.f32 %v47, %v48
    %v50 = vrot.slane %v49, 1
    %v51 = vadd.f32 %v49, %v50
    %s52 = vtos %v51
    %v53 = vstv %s52
    %v54 = vrcp.pop %v53
    %v55 = vmul.f32 %v53, %v54
    %v56 = vsub.f32 1.0, %v55
    %v57 = vmul.f32 %v54, %v56
    %v58 = vadd.f32 %v54, %v57
    %vm59 = vweird.f32 %v53
    %vm60 = vweird.f32 %v54
    %vm61 = vmor %vm59, %vm60
    %v62 = vsel %vm61, %v54, %v58
    %v63 = vand.u32 2147483647, %v53
    %vm64 = vcmp.eq.f32.partialorder %v63, 8.507059e+37
    %v65 = vand.u32 %v53, 2147483648
    %v66 = vor.u32 1.1754944e-38, %v65
    %v67 = vsel %vm64, %v66, %v62
    %v68 = vmul.f32 %v14, %v67
    %v69 = vmul.f32 %v15, %v67
    %v70 = vadd.f32 %v41, 2.220446e-16
    %v71 = vadd.f32 %v42, 2.220446e-16
    %v72 = vrcp.pop %v70
    %v73 = vmul.f32 %v70, %v72
    %v74 = vsub.f32 1.0, %v73
    %v75 = vmul.f32 %v72, %v74
    %v76 = vadd.f32 %v72, %v75
    %vm77 = vweird.f32 %v70
    %vm78 = vweird.f32 %v72
    %vm79 = vmor %vm77, %vm78
    %v80 = vsel %vm79, %v72, %v76
    %v81 = vand.u32 2147483647, %v70
    %vm82 = vcmp.eq.f32.partialorder %v81, 8.507059e+37
    %v83 = vand.u32 %v70, 2147483648
    %v84 = vor.u32 1.1754944e-38, %v83
    %v85 = vsel %vm82, %v84, %v80
    %v86 = vmul.f32 %v68, %v85
    %v87 = vrcp.pop %v71
    %v88 = vmul.f32 %v71, %v87
    %v89 = vsub.f32 1.0, %v88
    %v90 = vmul.f32 %v87, %v89
    %v91 = vadd.f32 %v87, %v90
    %vm92 = vweird.f32 %v71
    %vm93 = vweird.f32 %v87
    %vm94 = vmor %vm92, %vm93
    %v95 = vsel %vm94, %v87, %v91
    %v96 = vand.u32 2147483647, %v71
    %vm97 = vcmp.eq.f32.partialorder %v96, 8.507059e+37
    %v98 = vand.u32 %v71, 2147483648
    %v99 = vor.u32 1.1754944e-38, %v98
    %v100 = vsel %vm97, %v99, %v95
    %v101 = vmul.f32 %v69, %v100
    %v102 = vadd.f32 %v86, 2.220446e-16
    %v103 = vadd.f32 %v101, 2.220446e-16
    %v104 = vlog2.pop %v102
    %v105 = vmul.f32 %v104, 0.6931472
    %v106 = vlog2.pop %v103
    %v107 = vmul.f32 %v106, 0.6931472
    %v108 = vmul.f32 %v68, %v105
    %v109 = vmul.f32 %v69, %v107
    %v110 = vadd.f32 %v108, %v109
    %111 = vadd.xlane.f32.xlu0 %v110
    %v112 = vpop.xlane.xlu0 %111
    %v113 = vrot.slane %v112, 4
    %v114 = vadd.f32 %v112, %v113
    %v115 = vrot.slane %v114, 2
    %v116 = vadd.f32 %v114, %v115
    %v117 = vrot.slane %v116, 1
    %v118 = vadd.f32 %v116, %v117
    %s119 = vtos %v118
    %v120 = vstv %s119
    %vm121 = vcmask 0
    %122 = vst.msk [vmem:[#allocation2] sm:$0x1] %vm121, %v120
    // Predicated region
    $region10: #{_kld_loss.1} parent=1 // pred_check
      _
    $region11: #{_kld_loss.1} parent=1 // pred_check_branch
      %124 = sbr.rel (0) target = $region13
    $region12: #{_kld_loss.1} parent=1 // pred_region
      %126 = vsyncadd [#allocation3], 0
      %s128 = sshll.u32 [#allocation2], 4
      %s129 = int_to_ptr.vmem [resolvable:$true] %s128
      %s130 = sshll.u32 %s2, 4
      %s131 = int_to_ptr.hbm [resolvable:$true] %s130
      %133 = dma.vmem_to_hbm [thread:$0]  %s129, 16, %s131, [#allocation3]
    $region13: #{_kld_loss.1} parent=1 // pred_fallthru
      _
    // Predicated region
    $region14: #{_kld_loss.1} parent=1 // pred_check
      _
    $region15: #{_kld_loss.1} parent=1 // pred_check_branch
      %135 = sbr.rel (0) target = $region17
    $region16: #{_kld_loss.1} parent=1 // pred_region
      %137 = dma.done [#allocation3], 16
    $region17: #{_kld_loss.1} parent=1 // pred_fallthru
      _
    %138 = vsyncpa [#allocation3], 1

</llo_original>
